<compile_context>
chip_gen: v5e
topology: v5e:2x2
jax: 0.10.0
libtpu: 0.0.40
codegen_flags: <defaults>
</compile_context>

<pallas_src>
import jax
import jax.numpy as jnp
from jax.experimental import pallas as pl
from jax.experimental.pallas import tpu as pltpu


def channel_attention_kernel(q_ref, k_ref, v_ref, y_ref, o_scr):
    # Blocks are (1, C, HW); all math happens in the lane-dense (C, HW) layout.
    C = q_ref.shape[1]
    HW = q_ref.shape[2]
    T = HW // C                                             # number of column chunks

    qc = q_ref[0]                                           # (C, HW)
    kc = k_ref[0]                                           # (C, HW)
    vc = v_ref[0]                                           # (C, HW)

    # ---- ChannelAttention(pool_size=1): avg-pool + max-pool over spatial ----
    f = jnp.mean(kc, axis=1, keepdims=True) + jnp.max(kc, axis=1, keepdims=True)  # key(k)   (C,1)
    g = jnp.mean(qc, axis=1, keepdims=True) + jnp.max(qc, axis=1, keepdims=True)  # query(q) (C,1)

    # ---- s = bmm(f_x^T, g_x): rank-1 outer product, s[i, j] = f[i] * g[j] ---
    # (tiny K=1 matmul; MXU is idle here, so fill/drain latency is irrelevant
    #  and this is the most robust lowering of the outer product)
    s = jax.lax.dot_general(f, g, (((1,), (1,)), ((), ())),
                            preferred_element_type=jnp.float32)          # (C, C)

    # ---- beta = softmax(s, dim=1)  (softmax over the i axis = axis 0) -------
    s_max = jnp.max(s, axis=0, keepdims=True)
    e = jnp.exp(s - s_max)
    denom = jnp.sum(e, axis=0, keepdims=True)
    beta = e * pl.reciprocal(denom, approx=True)                          # (C, C)

    # ---- out = bmm(v.view(HW, C), beta), regrouped back to (C, HW) ----------
    # Exact chunk-wise identity in the native layout (requires HW % C == 0):
    #   o[:, r*C:(r+1)*C] = v_chw[:, r*C:(r+1)*C] @ beta
    for r in range(T):
        sl = slice(r * C, (r + 1) * C)
        o_scr[:, sl] = jnp.dot(vc[:, sl], beta,
                               preferred_element_type=jnp.float32)        # (C, C)

    # ---- epilogue: h_sigmoid(o) * (q + k + v), all lane-dense (C, HW) -------
    o = o_scr[...]                                                         # (C, HW)
    ori = qc + kc + vc                                                     # (C, HW)
    hsig = jnp.clip(o + 3.0, 0.0, 6.0) * (1.0 / 6.0)
    y_ref[0] = (hsig * ori).astype(y_ref.dtype)                            # full-width store


def channel_attention_forward(q, k, v):
    B, C, H, W = q.shape
    HW = H * W
    # TODO(synk): when HW % C != 0 the chunk decomposition does not hold; fall
    # back to an explicit in-kernel (HW, C) regroup for that case.
    assert HW % C == 0, "kernel assumes H*W % C == 0"

    # Order-preserving minor-dim merges only (no cross-channel data reorder).
    q3 = q.reshape(B, C, HW)
    k3 = k.reshape(B, C, HW)
    v3 = v.reshape(B, C, HW)

    spec = pl.BlockSpec((1, C, HW), lambda i: (i, 0, 0))

    y3 = pl.pallas_call(
        channel_attention_kernel,
        out_shape=jax.ShapeDtypeStruct((B, C, HW), q.dtype),
        grid=(B,),
        in_specs=[spec, spec, spec],
        out_specs=spec,
        scratch_shapes=[pltpu.VMEM((C, HW), jnp.float32)],
        compiler_params=pltpu.CompilerParams(
            dimension_semantics=("parallel",)),
    )(q3, k3, v3)

    # Inverse order-preserving split back to NCHW.
    return y3.reshape(B, C, H, W)


def reference_forward(q, k, v):
    """Pure-JAX reproduction of torch Channel_Attention.forward."""
    B, C, H, W = q.shape
    ori = q + k + v
    f = jnp.mean(k, axis=(2, 3)) + jnp.max(k, axis=(2, 3))   # key(k)   -> (B, C)
    g = jnp.mean(q, axis=(2, 3)) + jnp.max(q, axis=(2, 3))   # query(q) -> (B, C)
    s = f[:, :, None] * g[:, None, :]                        # (B, C, C)
    beta = jax.nn.softmax(s, axis=1)                         # dim=1
    h_x = v.reshape(B, H * W, C)                             # torch .view
    out = jnp.einsum('bnc,bcj->bnj', h_x, beta,
                     precision=jax.lax.Precision.HIGHEST)
    o = out.reshape(B, C, H, W)                              # torch .view
    o = jnp.clip(o + 3.0, 0.0, 6.0) / 6.0                    # h_sigmoid
    return o * ori


if __name__ == "__main__":
    B, C, H, W = 2, 32, 16, 16
    key = jax.random.PRNGKey(0)
    kq, kk, kv = jax.random.split(key, 3)
    q = 0.5 * jax.random.normal(kq, (B, C, H, W), jnp.float32)
    k = 0.5 * jax.random.normal(kk, (B, C, H, W), jnp.float32)
    v = 0.5 * jax.random.normal(kv, (B, C, H, W), jnp.float32)

    y = jax.jit(channel_attention_forward)(q, k, v)
    y = jax.block_until_ready(y)

    y_ref = reference_forward(q, k, v)
    err = float(jnp.max(jnp.abs(y - y_ref)))
    assert y.shape == (B, C, H, W), y.shape
    assert err < 1e-2, f"max abs err {err}"
    print("KERNEL_OK")
</pallas_src>

<mosaic_0001>
module attributes {stable_mosaic.version = 11 : i64} {
  func.func @channel_attention_kernel(%arg0: i32, %arg1: memref<1x32x256xf32, #tpu.memory_space<vmem>>, %arg2: memref<1x32x256xf32, #tpu.memory_space<vmem>>, %arg3: memref<1x32x256xf32, #tpu.memory_space<vmem>>, %arg4: memref<1x32x256xf32, #tpu.memory_space<vmem>>, %arg5: memref<32x256xf32, #tpu.memory_space<vmem>>) attributes {dimension_semantics = [#tpu.dimension_semantics<parallel>], iteration_bounds = array<i64: 2>, scalar_prefetch = 0 : i64, scratch_operands = 1 : i64, tpu.core_type = #tpu.core_type<tc>, window_params = [{transform_indices = @transform_0, window_bounds = array<i64: 1, 32, 256>}, {transform_indices = @transform_1, window_bounds = array<i64: 1, 32, 256>}, {transform_indices = @transform_2, window_bounds = array<i64: 1, 32, 256>}, {transform_indices = @transform_3, window_bounds = array<i64: 1, 32, 256>}]} {
    %c0 = arith.constant 0 : index
    %c0_0 = arith.constant 0 : index
    %c0_1 = arith.constant 0 : index
    %0 = vector.load %arg1[%c0, %c0_0, %c0_1] : memref<1x32x256xf32, #tpu.memory_space<vmem>>, vector<1x32x256xf32>
    %1 = vector.shape_cast %0 : vector<1x32x256xf32> to vector<32x256xf32>
    %c0_2 = arith.constant 0 : index
    %c0_3 = arith.constant 0 : index
    %c0_4 = arith.constant 0 : index
    %2 = vector.load %arg2[%c0_2, %c0_3, %c0_4] : memref<1x32x256xf32, #tpu.memory_space<vmem>>, vector<1x32x256xf32>
    %3 = vector.shape_cast %2 : vector<1x32x256xf32> to vector<32x256xf32>
    %c0_5 = arith.constant 0 : index
    %c0_6 = arith.constant 0 : index
    %c0_7 = arith.constant 0 : index
    %4 = vector.load %arg3[%c0_5, %c0_6, %c0_7] : memref<1x32x256xf32, #tpu.memory_space<vmem>>, vector<1x32x256xf32>
    %5 = vector.shape_cast %4 : vector<1x32x256xf32> to vector<32x256xf32>
    %cst = arith.constant dense<0.000000e+00> : vector<32xf32>
    %6 = vector.multi_reduction <add>, %3, %cst [1] : vector<32x256xf32> to vector<32xf32>
    %7 = vector.shape_cast %6 : vector<32xf32> to vector<32x1xf32>
    %cst_8 = arith.constant 2.560000e+02 : f32
    %8 = vector.broadcast %cst_8 : f32 to vector<32x1xf32>
    %9 = arith.divf %7, %8 : vector<32x1xf32>
    %cst_9 = arith.constant dense<0xFF800000> : vector<32xf32>
    %10 = vector.multi_reduction <maximumf>, %3, %cst_9 [1] : vector<32x256xf32> to vector<32xf32>
    %11 = vector.shape_cast %10 : vector<32xf32> to vector<32x1xf32>
    %12 = arith.addf %9, %11 : vector<32x1xf32>
    %cst_10 = arith.constant dense<0.000000e+00> : vector<32xf32>
    %13 = vector.multi_reduction <add>, %1, %cst_10 [1] : vector<32x256xf32> to vector<32xf32>
    %14 = vector.shape_cast %13 : vector<32xf32> to vector<32x1xf32>
    %cst_11 = arith.constant 2.560000e+02 : f32
    %15 = vector.broadcast %cst_11 : f32 to vector<32x1xf32>
    %16 = arith.divf %14, %15 : vector<32x1xf32>
    %cst_12 = arith.constant dense<0xFF800000> : vector<32xf32>
    %17 = vector.multi_reduction <maximumf>, %1, %cst_12 [1] : vector<32x256xf32> to vector<32xf32>
    %18 = vector.shape_cast %17 : vector<32xf32> to vector<32x1xf32>
    %19 = arith.addf %16, %18 : vector<32x1xf32>
    %cst_13 = arith.constant dense<0.000000e+00> : vector<32x32xf32>
    %20 = tpu.matmul %12, %19, %cst_13 {dimension_numbers = #tpu.dot_dimension_numbers<[1], [1], [0], [0], [0, 0, 1, 0], [], []>} : vector<32x1xf32>, vector<32x1xf32>, vector<32x32xf32> -> vector<32x32xf32>
    %cst_14 = arith.constant dense<0xFF800000> : vector<32xf32>
    %21 = vector.multi_reduction <maximumf>, %20, %cst_14 [0] : vector<32x32xf32> to vector<32xf32>
    %22 = vector.shape_cast %21 : vector<32xf32> to vector<1x32xf32>
    %23 = vector.broadcast %22 : vector<1x32xf32> to vector<32x32xf32>
    %24 = arith.subf %20, %23 : vector<32x32xf32>
    %25 = math.exp %24 : vector<32x32xf32>
    %cst_15 = arith.constant dense<0.000000e+00> : vector<32xf32>
    %26 = vector.multi_reduction <add>, %25, %cst_15 [0] : vector<32x32xf32> to vector<32xf32>
    %27 = vector.shape_cast %26 : vector<32xf32> to vector<1x32xf32>
    %28 = tpu.reciprocal %27 {approx = true} : vector<1x32xf32> -> vector<1x32xf32>
    %29 = vector.broadcast %28 : vector<1x32xf32> to vector<32x32xf32>
    %30 = arith.mulf %25, %29 : vector<32x32xf32>
    %31 = vector.extract_strided_slice %5 {offsets = [0, 0], sizes = [32, 32], strides = [1, 1]} : vector<32x256xf32> to vector<32x32xf32>
    %cst_16 = arith.constant dense<0.000000e+00> : vector<32x32xf32>
    %32 = tpu.matmul %31, %30, %cst_16 {dimension_numbers = #tpu.dot_dimension_numbers<[1], [0], [0], [1], [0, 0, 1, 1], [], []>} : vector<32x32xf32>, vector<32x32xf32>, vector<32x32xf32> -> vector<32x32xf32>
    %c0_17 = arith.constant 0 : index
    %c0_18 = arith.constant 0 : index
    %33 = vector.load %arg5[%c0_17, %c0_18] : memref<32x256xf32, #tpu.memory_space<vmem>>, vector<32x32xf32>
    tpu.vector_store %arg5[%c0_17, %c0_18], %32 {strides = array<i32>} : memref<32x256xf32, #tpu.memory_space<vmem>>, vector<32x32xf32>,
    %34 = vector.extract_strided_slice %5 {offsets = [0, 32], sizes = [32, 32], strides = [1, 1]} : vector<32x256xf32> to vector<32x32xf32>
    %cst_19 = arith.constant dense<0.000000e+00> : vector<32x32xf32>
    %35 = tpu.matmul %34, %30, %cst_19 {dimension_numbers = #tpu.dot_dimension_numbers<[1], [0], [0], [1], [0, 0, 1, 1], [], []>} : vector<32x32xf32>, vector<32x32xf32>, vector<32x32xf32> -> vector<32x32xf32>
    %c0_20 = arith.constant 0 : index
    %c32 = arith.constant 32 : index
    %36 = vector.load %arg5[%c0_20, %c32] : memref<32x256xf32, #tpu.memory_space<vmem>>, vector<32x32xf32>
    tpu.vector_store %arg5[%c0_20, %c32], %35 {strides = array<i32>} : memref<32x256xf32, #tpu.memory_space<vmem>>, vector<32x32xf32>,
    %37 = vector.extract_strided_slice %5 {offsets = [0, 64], sizes = [32, 32], strides = [1, 1]} : vector<32x256xf32> to vector<32x32xf32>
    %cst_21 = arith.constant dense<0.000000e+00> : vector<32x32xf32>
    %38 = tpu.matmul %37, %30, %cst_21 {dimension_numbers = #tpu.dot_dimension_numbers<[1], [0], [0], [1], [0, 0, 1, 1], [], []>} : vector<32x32xf32>, vector<32x32xf32>, vector<32x32xf32> -> vector<32x32xf32>
    %c0_22 = arith.constant 0 : index
    %c64 = arith.constant 64 : index
    %39 = vector.load %arg5[%c0_22, %c64] : memref<32x256xf32, #tpu.memory_space<vmem>>, vector<32x32xf32>
    tpu.vector_store %arg5[%c0_22, %c64], %38 {strides = array<i32>} : memref<32x256xf32, #tpu.memory_space<vmem>>, vector<32x32xf32>,
    %40 = vector.extract_strided_slice %5 {offsets = [0, 96], sizes = [32, 32], strides = [1, 1]} : vector<32x256xf32> to vector<32x32xf32>
    %cst_23 = arith.constant dense<0.000000e+00> : vector<32x32xf32>
    %41 = tpu.matmul %40, %30, %cst_23 {dimension_numbers = #tpu.dot_dimension_numbers<[1], [0], [0], [1], [0, 0, 1, 1], [], []>} : vector<32x32xf32>, vector<32x32xf32>, vector<32x32xf32> -> vector<32x32xf32>
    %c0_24 = arith.constant 0 : index
    %c96 = arith.constant 96 : index
    %42 = vector.load %arg5[%c0_24, %c96] : memref<32x256xf32, #tpu.memory_space<vmem>>, vector<32x32xf32>
    tpu.vector_store %arg5[%c0_24, %c96], %41 {strides = array<i32>} : memref<32x256xf32, #tpu.memory_space<vmem>>, vector<32x32xf32>,
    %43 = vector.extract_strided_slice %5 {offsets = [0, 128], sizes = [32, 32], strides = [1, 1]} : vector<32x256xf32> to vector<32x32xf32>
    %cst_25 = arith.constant dense<0.000000e+00> : vector<32x32xf32>
    %44 = tpu.matmul %43, %30, %cst_25 {dimension_numbers = #tpu.dot_dimension_numbers<[1], [0], [0], [1], [0, 0, 1, 1], [], []>} : vector<32x32xf32>, vector<32x32xf32>, vector<32x32xf32> -> vector<32x32xf32>
    %c0_26 = arith.constant 0 : index
    %c128 = arith.constant 128 : index
    %45 = vector.load %arg5[%c0_26, %c128] : memref<32x256xf32, #tpu.memory_space<vmem>>, vector<32x32xf32>
    tpu.vector_store %arg5[%c0_26, %c128], %44 {strides = array<i32>} : memref<32x256xf32, #tpu.memory_space<vmem>>, vector<32x32xf32>,
    %46 = vector.extract_strided_slice %5 {offsets = [0, 160], sizes = [32, 32], strides = [1, 1]} : vector<32x256xf32> to vector<32x32xf32>
    %cst_27 = arith.constant dense<0.000000e+00> : vector<32x32xf32>
    %47 = tpu.matmul %46, %30, %cst_27 {dimension_numbers = #tpu.dot_dimension_numbers<[1], [0], [0], [1], [0, 0, 1, 1], [], []>} : vector<32x32xf32>, vector<32x32xf32>, vector<32x32xf32> -> vector<32x32xf32>
    %c0_28 = arith.constant 0 : index
    %c160 = arith.constant 160 : index
    %48 = vector.load %arg5[%c0_28, %c160] : memref<32x256xf32, #tpu.memory_space<vmem>>, vector<32x32xf32>
    tpu.vector_store %arg5[%c0_28, %c160], %47 {strides = array<i32>} : memref<32x256xf32, #tpu.memory_space<vmem>>, vector<32x32xf32>,
    %49 = vector.extract_strided_slice %5 {offsets = [0, 192], sizes = [32, 32], strides = [1, 1]} : vector<32x256xf32> to vector<32x32xf32>
    %cst_29 = arith.constant dense<0.000000e+00> : vector<32x32xf32>
    %50 = tpu.matmul %49, %30, %cst_29 {dimension_numbers = #tpu.dot_dimension_numbers<[1], [0], [0], [1], [0, 0, 1, 1], [], []>} : vector<32x32xf32>, vector<32x32xf32>, vector<32x32xf32> -> vector<32x32xf32>
    %c0_30 = arith.constant 0 : index
    %c192 = arith.constant 192 : index
    %51 = vector.load %arg5[%c0_30, %c192] : memref<32x256xf32, #tpu.memory_space<vmem>>, vector<32x32xf32>
    tpu.vector_store %arg5[%c0_30, %c192], %50 {strides = array<i32>} : memref<32x256xf32, #tpu.memory_space<vmem>>, vector<32x32xf32>,
    %52 = vector.extract_strided_slice %5 {offsets = [0, 224], sizes = [32, 32], strides = [1, 1]} : vector<32x256xf32> to vector<32x32xf32>
    %cst_31 = arith.constant dense<0.000000e+00> : vector<32x32xf32>
    %53 = tpu.matmul %52, %30, %cst_31 {dimension_numbers = #tpu.dot_dimension_numbers<[1], [0], [0], [1], [0, 0, 1, 1], [], []>} : vector<32x32xf32>, vector<32x32xf32>, vector<32x32xf32> -> vector<32x32xf32>
    %c0_32 = arith.constant 0 : index
    %c224 = arith.constant 224 : index
    %54 = vector.load %arg5[%c0_32, %c224] : memref<32x256xf32, #tpu.memory_space<vmem>>, vector<32x32xf32>
    tpu.vector_store %arg5[%c0_32, %c224], %53 {strides = array<i32>} : memref<32x256xf32, #tpu.memory_space<vmem>>, vector<32x32xf32>,
    %c0_33 = arith.constant 0 : index
    %c0_34 = arith.constant 0 : index
    %55 = vector.load %arg5[%c0_33, %c0_34] : memref<32x256xf32, #tpu.memory_space<vmem>>, vector<32x256xf32>
    %56 = arith.addf %1, %3 : vector<32x256xf32>
    %57 = arith.addf %56, %5 : vector<32x256xf32>
    %cst_35 = arith.constant 3.000000e+00 : f32
    %58 = vector.broadcast %cst_35 : f32 to vector<32x256xf32>
    %59 = arith.addf %55, %58 : vector<32x256xf32>
    %cst_36 = arith.constant 0.000000e+00 : f32
    %cst_37 = arith.constant 6.000000e+00 : f32
    %60 = vector.broadcast %cst_36 : f32 to vector<32x256xf32>
    %61 = arith.maximumf %60, %59 : vector<32x256xf32>
    %62 = vector.broadcast %cst_37 : f32 to vector<32x256xf32>
    %63 = arith.minimumf %62, %61 : vector<32x256xf32>
    %cst_38 = arith.constant 0.166666672 : f32
    %64 = vector.broadcast %cst_38 : f32 to vector<32x256xf32>
    %65 = arith.mulf %63, %64 : vector<32x256xf32>
    %66 = arith.mulf %65, %57 : vector<32x256xf32>
    %c0_39 = arith.constant 0 : index
    %c0_40 = arith.constant 0 : index
    %c0_41 = arith.constant 0 : index
    %67 = vector.load %arg4[%c0_39, %c0_40, %c0_41] : memref<1x32x256xf32, #tpu.memory_space<vmem>>, vector<1x32x256xf32>
    %68 = vector.shape_cast %67 : vector<1x32x256xf32> to vector<32x256xf32>
    %69 = vector.shape_cast %66 : vector<32x256xf32> to vector<1x32x256xf32>
    tpu.vector_store %arg4[%c0_39, %c0_40, %c0_41], %69 {strides = array<i32>} : memref<1x32x256xf32, #tpu.memory_space<vmem>>, vector<1x32x256xf32>,
    return
  }
  func.func @transform_0(%arg0: i32) -> (i32, i32, i32) {
    %c0_i32 = arith.constant 0 : i32
    %c0_i32_0 = arith.constant 0 : i32
    %c0_i32_1 = arith.constant 0 : i32
    return %arg0, %c0_i32, %c0_i32_0 : i32, i32, i32
  }
  func.func @transform_1(%arg0: i32) -> (i32, i32, i32) {
    %c0_i32 = arith.constant 0 : i32
    %c0_i32_0 = arith.constant 0 : i32
    %c0_i32_1 = arith.constant 0 : i32
    return %arg0, %c0_i32, %c0_i32_0 : i32, i32, i32
  }
  func.func @transform_2(%arg0: i32) -> (i32, i32, i32) {
    %c0_i32 = arith.constant 0 : i32
    %c0_i32_0 = arith.constant 0 : i32
    %c0_i32_1 = arith.constant 0 : i32
    return %arg0, %c0_i32, %c0_i32_0 : i32, i32, i32
  }
  func.func @transform_3(%arg0: i32) -> (i32, i32, i32) {
    %c0_i32 = arith.constant 0 : i32
    %c0_i32_0 = arith.constant 0 : i32
    %c0_i32_1 = arith.constant 0 : i32
    return %arg0, %c0_i32, %c0_i32_0 : i32, i32, i32
  }
}

</mosaic_0001>

<llo_original>
// kernel: channel_attention_forward.1
$region0: #{channel_attention_forward.1}
  #allocation0 [shape = 'u32[]', space=smem, size = 0x4, offset = 0x4, fixed_abs, tag = 'smem constant byte address 0x4 - core index']
  #allocation1 [shape = 'u32[72,128]{1,0:T(1,128)}', space=vmem, size = 0x9000, scoped, tag = 'internal scratch']
  #allocation2 [shape = 'f32[32,256]{1,0:T(8,128)}', space=vmem, size = 0x8000, scoped, tag = 'scratch operand']
  %s0 = inlined_call_operand.vmem [shape: f32[2,32,256], index: 0, kind: input, shape index: {}]
  %s1 = inlined_call_operand.vmem [shape: f32[2,32,256], index: 1, kind: input, shape index: {}]
  %s2 = inlined_call_operand.vmem [shape: f32[2,32,256], index: 2, kind: input, shape index: {}]
  %s3 = inlined_call_operand.vmem [shape: f32[2,32,256], index: 3, kind: output, shape index: {}]
  %s4 = sld [smem:[#allocation0]]
  $region45: #{channel_attention_forward.1} parent=0
    _
  %s6 = ssub.s32 1, %s4
  %s7 = scalar_select 0, %s6, %s4
  loop: start=0, step=1, limit=4
  $region2: #{channel_attention_forward.1} parent=0 // loop_pre_header
    _
  $region3: #{channel_attention_forward.1} parent=0 // loop_header
    %s9 = sphi 0, %s13
    %p10 = scmp.ge.s32.totalorder %s9, 4
    %s19 = sphi 0, %s21
    %s22 = sphi 0, %s19
    %s23 = sphi 0, %s22
    %s39 = sphi 0, %s23
    %s45 = sphi 0, %s47
    %s48 = sphi 0, %s45
    %s49 = sphi 0, %s48
    %s65 = sphi 0, %s49
    %s71 = sphi 0, %s73
    %s74 = sphi 0, %s71
    %s75 = sphi 0, %s74
    %s91 = sphi 0, %s75
    %s97 = sphi 0, %s99
    %s100 = sphi 0, %s97
    %s101 = sphi 0, %s100
    %s117 = sphi 0, %s101
  $region4: #{channel_attention_forward.1} parent=0 // loop_header_branch
    %12 = sbr.rel (%p10) target = $region8
  $region5: #{channel_attention_forward.1} parent=0 // loop_body
    %s14 = ssub.s32 %s9, 1
    %s15 = ssub.s32 %s9, 2
    %s16 = sadd.s32 %s9, 1
    %s17 = ssub.s32 %s9, %s16
    %p18 = scmp.eq.s32.totalorder %s17, 0
    %s20 = sadd.s32 %s19, 1
    %s21 = scalar_select %p18, %s19, %s20
    %p24 = pneg %p18
    %p25 = scmp.eq.s32.totalorder %s9, 1
    %p26 = por %p24, %p25
    %p27 = scmp.ne.s32.totalorder %s19, %s22
    %p28 = scmp.eq.s32.totalorder %s9, 0
    %p29 = por %p27, %p28
    %p30 = scmp.ne.s32.totalorder %s19, %s22
    %p31 = scmp.eq.s32.totalorder %s14, 1
    %p32 = por %p30, %p31
    %p33 = scmp.ne.s32.totalorder %s22, %s23
    %p34 = scmp.eq.s32.totalorder %s14, 0
    %p35 = por %p33, %p34
    %p36 = scmp.ne.s32.totalorder %s22, %s23
    %p37 = scmp.eq.s32.totalorder %s15, 1
    %p38 = por %p36, %p37
    %p40 = scmp.ne.s32.totalorder %s23, %s39
    %p41 = scmp.eq.s32.totalorder %s15, 0
    %p42 = por %p40, %p41
    %s43 = ssub.s32 %s9, %s16
    %p44 = scmp.eq.s32.totalorder %s43, 0
    %s46 = sadd.s32 %s45, 1
    %s47 = scalar_select %p44, %s45, %s46
    %p50 = pneg %p44
    %p51 = scmp.eq.s32.totalorder %s9, 1
    %p52 = por %p50, %p51
    %p53 = scmp.ne.s32.totalorder %s45, %s48
    %p54 = scmp.eq.s32.totalorder %s9, 0
    %p55 = por %p53, %p54
    %p56 = scmp.ne.s32.totalorder %s45, %s48
    %p57 = scmp.eq.s32.totalorder %s14, 1
    %p58 = por %p56, %p57
    %p59 = scmp.ne.s32.totalorder %s48, %s49
    %p60 = scmp.eq.s32.totalorder %s14, 0
    %p61 = por %p59, %p60
    %p62 = scmp.ne.s32.totalorder %s48, %s49
    %p63 = scmp.eq.s32.totalorder %s15, 1
    %p64 = por %p62, %p63
    %p66 = scmp.ne.s32.totalorder %s49, %s65
    %p67 = scmp.eq.s32.totalorder %s15, 0
    %p68 = por %p66, %p67
    %s69 = ssub.s32 %s9, %s16
    %p70 = scmp.eq.s32.totalorder %s69, 0
    %s72 = sadd.s32 %s71, 1
    %s73 = scalar_select %p70, %s71, %s72
    %p76 = pneg %p70
    %p77 = scmp.eq.s32.totalorder %s9, 1
    %p78 = por %p76, %p77
    %p79 = scmp.ne.s32.totalorder %s71, %s74
    %p80 = scmp.eq.s32.totalorder %s9, 0
    %p81 = por %p79, %p80
    %p82 = scmp.ne.s32.totalorder %s71, %s74
    %p83 = scmp.eq.s32.totalorder %s14, 1
    %p84 = por %p82, %p83
    %p85 = scmp.ne.s32.totalorder %s74, %s75
    %p86 = scmp.eq.s32.totalorder %s14, 0
    %p87 = por %p85, %p86
    %p88 = scmp.ne.s32.totalorder %s74, %s75
    %p89 = scmp.eq.s32.totalorder %s15, 1
    %p90 = por %p88, %p89
    %p92 = scmp.ne.s32.totalorder %s75, %s91
    %p93 = scmp.eq.s32.totalorder %s15, 0
    %p94 = por %p92, %p93
    %s95 = ssub.s32 %s9, %s16
    %p96 = scmp.eq.s32.totalorder %s95, 0
    %s98 = sadd.s32 %s97, 1
    %s99 = scalar_select %p96, %s97, %s98
    %p102 = pneg %p96
    %p103 = scmp.eq.s32.totalorder %s9, 1
    %p104 = por %p102, %p103
    %p105 = scmp.ne.s32.totalorder %s97, %s100
    %p106 = scmp.eq.s32.totalorder %s9, 0
    %p107 = por %p105, %p106
    %p108 = scmp.ne.s32.totalorder %s97, %s100
    %p109 = scmp.eq.s32.totalorder %s14, 1
    %p110 = por %p108, %p109
    %p111 = scmp.ne.s32.totalorder %s100, %s101
    %p112 = scmp.eq.s32.totalorder %s14, 0
    %p113 = por %p111, %p112
    %p114 = scmp.ne.s32.totalorder %s100, %s101
    %p115 = scmp.eq.s32.totalorder %s15, 1
    %p116 = por %p114, %p115
    %p118 = scmp.ne.s32.totalorder %s101, %s117
    %p119 = scmp.eq.s32.totalorder %s15, 0
    %p120 = por %p118, %p119
    %p121 = scmp.le.s32.totalorder 1, %s9
    %p122 = scmp.lt.s32.totalorder %s9, 3
    %p123 = pnand %p121, %p122
    %p124 = pneg %p123
    // Predicated region
    $region9: #{channel_attention_forward.1} parent=5 // pred_check
      _
    $region10: #{channel_attention_forward.1} parent=5 // pred_check_branch
      %126 = sbr.rel (%p123) target = $region12
    $region11: #{channel_attention_forward.1} parent=5 // pred_region
      %s127 = ssub.s32 %s9, 1
    $region12: #{channel_attention_forward.1} parent=5 // pred_fallthru
      _
    %p128 = scmp.lt.s32.totalorder %s9, 2
    // Predicated region
    $region13: #{channel_attention_forward.1} parent=5 // pred_check
      %p129 = pneg %p128
    $region14: #{channel_attention_forward.1} parent=5 // pred_check_branch
      %131 = sbr.rel (%p129) target = $region16
    $region15: #{channel_attention_forward.1} parent=5 // pred_region
      // Predicated region
      $region17: #{channel_attention_forward.1} parent=15 // pred_check
        %p132 = pneg %p29
      $region18: #{channel_attention_forward.1} parent=15 // pred_check_branch
        %134 = sbr.rel (%p132) target = $region20
      $region19: #{channel_attention_forward.1} parent=15 // pred_region
        %p135 = scmp.lt.s32.totalorder %s9, 1
        %s136 = scalar_select %p135, %s9, 1
        %s137 = smul.addr %s136, 8
        %s138 = smul.addr %s137, 8
        %s139 = scalar_lea.vmem %s0, %s138
      $region20: #{channel_attention_forward.1} parent=15 // pred_fallthru
        _
      // Predicated region
      $region21: #{channel_attention_forward.1} parent=15 // pred_check
        %p140 = pneg %p55
      $region22: #{channel_attention_forward.1} parent=15 // pred_check_branch
        %142 = sbr.rel (%p140) target = $region24
      $region23: #{channel_attention_forward.1} parent=15 // pred_region
        %p143 = scmp.lt.s32.totalorder %s9, 1
        %s144 = scalar_select %p143, %s9, 1
        %s145 = smul.addr %s144, 8
        %s146 = smul.addr %s145, 8
        %s147 = scalar_lea.vmem %s1, %s146
      $region24: #{channel_attention_forward.1} parent=15 // pred_fallthru
        _
      // Predicated region
      $region25: #{channel_attention_forward.1} parent=15 // pred_check
        %p148 = pneg %p81
      $region26: #{channel_attention_forward.1} parent=15 // pred_check_branch
        %150 = sbr.rel (%p148) target = $region28
      $region27: #{channel_attention_forward.1} parent=15 // pred_region
        %p151 = scmp.lt.s32.totalorder %s9, 1
        %s152 = scalar_select %p151, %s9, 1
        %s153 = smul.addr %s152, 8
        %s154 = smul.addr %s153, 8
        %s155 = scalar_lea.vmem %s2, %s154
      $region28: #{channel_attention_forward.1} parent=15 // pred_fallthru
        _
    $region16: #{channel_attention_forward.1} parent=5 // pred_fallthru
      _
    %p156 = scmp.le.s32.totalorder 1, %s9
    %p157 = scmp.lt.s32.totalorder %s9, 3
    %p158 = pnand %p156, %p157
    %p159 = pneg %p158
    // Predicated region
    $region29: #{channel_attention_forward.1} parent=5 // pred_check
      _
    $region30: #{channel_attention_forward.1} parent=5 // pred_check_branch
      %161 = sbr.rel (%p158) target = $region32
    $region31: #{channel_attention_forward.1} parent=5 // pred_region
      %s162 = ssub.s32 %s9, 1
      %p163 = scmp.lt.s32.totalorder %s14, 1
      %s164 = scalar_select %p163, %s14, 1
      %s165 = smul.addr %s164, 8
      %s166 = smul.addr %s165, 8
      %s167 = scalar_lea.vmem %s0, %s166
      %p168 = pneg %p35
      %p169 = pneg %p32
      %p170 = scmp.lt.s32.totalorder %s14, 1
      %s171 = scalar_select %p170, %s14, 1
      %s172 = smul.addr %s171, 8
      %s173 = smul.addr %s172, 8
      %s174 = scalar_lea.vmem %s1, %s173
      %p175 = pneg %p61
      %p176 = pneg %p58
      %p177 = scmp.lt.s32.totalorder %s14, 1
      %s178 = scalar_select %p177, %s14, 1
      %s179 = smul.addr %s178, 8
      %s180 = smul.addr %s179, 8
      %s181 = scalar_lea.vmem %s2, %s180
      %p182 = pneg %p87
      %p183 = pneg %p84
      %p184 = pneg %p113
      %p185 = pneg %p110
      %p186 = scmp.lt.s32.totalorder %s14, 1
      %s187 = scalar_select %p186, %s14, 1
      %s188 = smul.addr %s187, 8
      %s189 = smul.addr %s188, 8
      %s190 = scalar_lea.vmem %s3, %s189
      %p191 = scmp.lt.s32.totalorder %s14, 1
      %s192 = scalar_select %p191, %s14, 1
      %s193 = smul.addr %s192, 8
      %s194 = smul.addr %s193, 8
      %s195 = scalar_lea.vmem %s0, %s194
      %p196 = scmp.lt.s32.totalorder %s14, 1
      %s197 = scalar_select %p196, %s14, 1
      %s198 = smul.addr %s197, 8
      %s199 = smul.addr %s198, 8
      %s200 = scalar_lea.vmem %s1, %s199
      %p201 = scmp.lt.s32.totalorder %s14, 1
      %s202 = scalar_select %p201, %s14, 1
      %s203 = smul.addr %s202, 8
      %s204 = smul.addr %s203, 8
      %s205 = scalar_lea.vmem %s2, %s204
      %p206 = scmp.lt.s32.totalorder %s14, 1
      %s207 = scalar_select %p206, %s14, 1
      %s208 = smul.addr %s207, 8
      %s209 = smul.addr %s208, 8
      %s210 = scalar_lea.vmem %s3, %s209
      %v211 = vld [vmem:[%s195] sm:$0xff]
      %v212 = vld [vmem:[%s195 + $0x8] sm:$0xff]
      %v213 = vld [vmem:[%s195 + $0x10] sm:$0xff]
      %v214 = vld [vmem:[%s195 + $0x18] sm:$0xff]
      %v215 = vld [vmem:[%s195 + $0x20] sm:$0xff]
      %v216 = vld [vmem:[%s195 + $0x28] sm:$0xff]
      %v217 = vld [vmem:[%s195 + $0x30] sm:$0xff]
      %v218 = vld [vmem:[%s195 + $0x38] sm:$0xff]
      %v219 = vld [vmem:[%s200] sm:$0xff]
      %v220 = vld [vmem:[%s200 + $0x8] sm:$0xff]
      %v221 = vld [vmem:[%s200 + $0x10] sm:$0xff]
      %v222 = vld [vmem:[%s200 + $0x18] sm:$0xff]
      %v223 = vld [vmem:[%s200 + $0x20] sm:$0xff]
      %v224 = vld [vmem:[%s200 + $0x28] sm:$0xff]
      %v225 = vld [vmem:[%s200 + $0x30] sm:$0xff]
      %v226 = vld [vmem:[%s200 + $0x38] sm:$0xff]
      %v227 = vld [vmem:[%s205] sm:$0xff]
      %v228 = vld [vmem:[%s205 + $0x8] sm:$0xff]
      %v229 = vld [vmem:[%s205 + $0x10] sm:$0xff]
      %v230 = vld [vmem:[%s205 + $0x18] sm:$0xff]
      %v231 = vld [vmem:[%s205 + $0x20] sm:$0xff]
      %v232 = vld [vmem:[%s205 + $0x28] sm:$0xff]
      %v233 = vld [vmem:[%s205 + $0x30] sm:$0xff]
      %v234 = vld [vmem:[%s205 + $0x38] sm:$0xff]
      %v235 = vadd.f32 %v219, %v220
      %236 = vadd.xlane.f32.xlu0 %v235
      %v237 = vpop.xlane.xlu0 %236
      %v238 = vadd.f32 %v221, %v222
      %239 = vadd.xlane.f32.xlu0 %v238
      %v240 = vpop.xlane.xlu0 %239
      %v241 = vadd.f32 %v223, %v224
      %242 = vadd.xlane.f32.xlu0 %v241
      %v243 = vpop.xlane.xlu0 %242
      %v244 = vadd.f32 %v225, %v226
      %245 = vadd.xlane.f32.xlu0 %v244
      %v246 = vpop.xlane.xlu0 %245
      %v247 = vrcp.pop 256.0
      %v248 = vmul.f32 256.0, %v247
      %v249 = vsub.f32 1.0, %v248
      %v250 = vmul.f32 %v247, %v249
      %v251 = vadd.f32 %v247, %v250
      %vm252 = vweird.f32 %v247
      %v253 = vsel %vm252, %v247, %v251
      %v254 = vmul.f32 %v237, %v253
      %v255 = vmul.f32 %v240, %v253
      %v256 = vmul.f32 %v243, %v253
      %v257 = vmul.f32 %v246, %v253
      %v258 = vmax.f32 %v219, %v220
      %259 = vmax.xlane.f32.xlu0 %v258
      %v260 = vpop.xlane.xlu0 %259
      %v261 = vmax.f32 %v221, %v222
      %262 = vmax.xlane.f32.xlu0 %v261
      %v263 = vpop.xlane.xlu0 %262
      %v264 = vmax.f32 %v223, %v224
      %265 = vmax.xlane.f32.xlu0 %v264
      %v266 = vpop.xlane.xlu0 %265
      %v267 = vmax.f32 %v225, %v226
      %268 = vmax.xlane.f32.xlu0 %v267
      %v269 = vpop.xlane.xlu0 %268
      %v270 = vadd.f32 %v254, %v260
      %v271 = vadd.f32 %v255, %v263
      %v272 = vadd.f32 %v256, %v266
      %v273 = vadd.f32 %v257, %v269
      %v274 = vadd.f32 %v211, %v212
      %275 = vadd.xlane.f32.xlu0 %v274
      %v276 = vpop.xlane.xlu0 %275
      %v277 = vadd.f32 %v213, %v214
      %278 = vadd.xlane.f32.xlu0 %v277
      %v279 = vpop.xlane.xlu0 %278
      %v280 = vadd.f32 %v215, %v216
      %281 = vadd.xlane.f32.xlu0 %v280
      %v282 = vpop.xlane.xlu0 %281
      %v283 = vadd.f32 %v217, %v218
      %284 = vadd.xlane.f32.xlu0 %v283
      %v285 = vpop.xlane.xlu0 %284
      %v286 = vmul.f32 %v276, %v253
      %v287 = vmul.f32 %v279, %v253
      %v288 = vmul.f32 %v282, %v253
      %v289 = vmul.f32 %v285, %v253
      %v290 = vmax.f32 %v211, %v212
      %291 = vmax.xlane.f32.xlu0 %v290
      %v292 = vpop.xlane.xlu0 %291
      %v293 = vmax.f32 %v213, %v214
      %294 = vmax.xlane.f32.xlu0 %v293
      %v295 = vpop.xlane.xlu0 %294
      %v296 = vmax.f32 %v215, %v216
      %297 = vmax.xlane.f32.xlu0 %v296
      %v298 = vpop.xlane.xlu0 %297
      %v299 = vmax.f32 %v217, %v218
      %300 = vmax.xlane.f32.xlu0 %v299
      %v301 = vpop.xlane.xlu0 %300
      %v302 = vadd.f32 %v286, %v292
      %v303 = vadd.f32 %v287, %v295
      %v304 = vadd.f32 %v288, %v298
      %v305 = vadd.f32 %v289, %v301
      %vm306 = vcmask 7168
      %v308 = vsel %vm306, %v270, 0
      %v311 = vsel %vm306, %v271, 0
      %v314 = vsel %vm306, %v272, 0
      %v317 = vsel %vm306, %v273, 0
      %v320 = vsel %vm306, %v302, 0
      %v323 = vsel %vm306, %v303, 0
      %v326 = vsel %vm306, %v304, 0
      %v329 = vsel %vm306, %v305, 0
      %331 = vmatpush.xpose.msra.mxu0 0.0
      %332 = vmatpush.xpose.msra.mxu0 0.0
      %333 = vmatpush.xpose.msra.mxu0 0.0
      %334 = vmatpush.xpose.msra.mxu0 0.0
      %335 = vmatpush.xpose.msra.mxu0 0.0
      %336 = vmatpush.xpose.msra.mxu0 0.0
      %337 = vmatpush.xpose.msra.mxu0 0.0
      %338 = vmatpush.xpose.msra.mxu0 0.0
      %339 = vmatpush.xpose.msra.mxu0 0.0
      %340 = vmatpush.xpose.msra.mxu0 0.0
      %341 = vmatpush.xpose.msra.mxu0 0.0
      %342 = vmatpush.xpose.msra.mxu0 0.0
      %343 = vmatpush.xpose.msra.mxu0 %v329
      %344 = vmatpush.xpose.msra.mxu0 %v326
      %345 = vmatpush.xpose.msra.mxu0 %v323
      %346 = vmatpush.xpose.msra.mxu0 %v320
      %347 = vmatmul.f32.gmra.mxu0 %v308
      %v348 = vpop.f32.mrf.mxu0
      %v349 = vadd.f32 0.0, %v348
      %350 = vmatmul.f32.gmra.mxu0 %v311
      %v351 = vpop.f32.mrf.mxu0
      %v352 = vadd.f32 0.0, %v351
      %353 = vmatmul.f32.gmra.mxu0 %v314
      %v354 = vpop.f32.mrf.mxu0
      %v355 = vadd.f32 0.0, %v354
      %356 = vmatmul.f32.gmra.mxu0 %v317
      %v357 = vpop.f32.mrf.mxu0
      %v358 = vadd.f32 0.0, %v357
      %359 = vdwg.mxu0
      %vm360 = vcmask 261120
      %v361 = vsel %vm360, %v349, -inf
      %v362 = vsel %vm360, %v352, -inf
      %v363 = vsel %vm360, %v355, -inf
      %v364 = vsel %vm360, %v358, -inf
      %v365 = vmax.f32 %v361, %v362
      %v366 = vmax.f32 %v363, %v364
      %v367 = vmax.f32 %v365, %v366
      %v368 = vrot.slane %v367, 4
      %v369 = vmax.f32 %v367, %v368
      %v370 = vrot.slane %v369, 2
      %v371 = vmax.f32 %v369, %v370
      %v372 = vrot.slane %v371, 1
      %v373 = vmax.f32 %v371, %v372
      %v374 = vsub.f32 %v349, %v373
      %v375 = vsub.f32 %v352, %v373
      %v376 = vsub.f32 %v355, %v373
      %v377 = vsub.f32 %v358, %v373
      %v378 = vmul.f32 %v374, 1.442695
      %v379 = vpow.pop %v378
      %v380 = vmul.f32 %v375, 1.442695
      %v381 = vpow.pop %v380
      %v382 = vmul.f32 %v376, 1.442695
      %v383 = vpow.pop %v382
      %v384 = vmul.f32 %v377, 1.442695
      %v385 = vpow.pop %v384
      %v386 = vsel %vm360, %v379, 0.0
      %v387 = vsel %vm360, %v381, 0.0
      %v388 = vadd.f32 %v386, %v387
      %v389 = vsel %vm360, %v383, 0.0
      %v390 = vadd.f32 %v388, %v389
      %v391 = vsel %vm360, %v385, 0.0
      %v392 = vadd.f32 %v390, %v391
      %v393 = vrot.slane %v392, 4
      %v394 = vadd.f32 %v392, %v393
      %v395 = vrot.slane %v394, 2
      %v396 = vadd.f32 %v394, %v395
      %v397 = vrot.slane %v396, 1
      %v398 = vadd.f32 %v396, %v397
      %v399 = vrcp.pop %v398
      %v400 = vmul.f32 %v379, %v399
      %v401 = vmul.f32 %v381, %v399
      %v402 = vmul.f32 %v383, %v399
      %v403 = vmul.f32 %v385, %v399
      %v405 = vsel %vm360, %v227, 0
      %v408 = vsel %vm360, %v229, 0
      %v411 = vsel %vm360, %v231, 0
      %v414 = vsel %vm360, %v233, 0
      %416 = vmatpush.msra.mxu0 0.0
      %417 = vmatpush.msra.mxu0 0.0
      %418 = vmatpush.msra.mxu0 0.0
      %419 = vmatpush.msra.mxu0 0.0
      %420 = vmatpush.msra.mxu0 0.0
      %421 = vmatpush.msra.mxu0 0.0
      %422 = vmatpush.msra.mxu0 0.0
      %423 = vmatpush.msra.mxu0 0.0
      %424 = vmatpush.msra.mxu0 0.0
      %425 = vmatpush.msra.mxu0 0.0
      %426 = vmatpush.msra.mxu0 0.0
      %427 = vmatpush.msra.mxu0 0.0
      %428 = vmatpush.msra.mxu0 %v403
      %429 = vmatpush.msra.mxu0 %v402
      %430 = vmatpush.msra.mxu0 %v401
      %431 = vmatpush.msra.mxu0 %v400
      %432 = vmatmul.f32.gmra.mxu0 %v405
      %v433 = vpop.f32.mrf.mxu0
      %v434 = vadd.f32 0.0, %v433
      %435 = vmatmul.f32.gmra.mxu0 %v408
      %v436 = vpop.f32.mrf.mxu0
      %v437 = vadd.f32 0.0, %v436
      %438 = vmatmul.f32.gmra.mxu0 %v411
      %v439 = vpop.f32.mrf.mxu0
      %v440 = vadd.f32 0.0, %v439
      %441 = vmatmul.f32.gmra.mxu0 %v414
      %v442 = vpop.f32.mrf.mxu0
      %v443 = vadd.f32 0.0, %v442
      %444 = vdwg.mxu0
      %445 = vst.msk [vmem:[#allocation2] sm:$0xff] %vm360, %v434
      %446 = vst.msk [vmem:[#allocation2 + $0x10] sm:$0xff] %vm360, %v437
      %447 = vst.msk [vmem:[#allocation2 + $0x20] sm:$0xff] %vm360, %v440
      %448 = vst.msk [vmem:[#allocation2 + $0x30] sm:$0xff] %vm360, %v443
      %449 = vrot.lane.b32.xlu0 %v227, 96
      %v450 = vpop.permute.xlu0 %449
      %451 = vrot.lane.b32.xlu0 %v229, 96
      %v452 = vpop.permute.xlu0 %451
      %453 = vrot.lane.b32.xlu0 %v231, 96
      %v454 = vpop.permute.xlu0 %453
      %455 = vrot.lane.b32.xlu0 %v233, 96
      %v456 = vpop.permute.xlu0 %455
      %v457 = vsel %vm360, %v450, 0
      %v459 = vsel %vm360, %v452, 0
      %v461 = vsel %vm360, %v454, 0
      %v463 = vsel %vm360, %v456, 0
      %465 = vmatpush.msra.mxu0 0.0
      %466 = vmatpush.msra.mxu0 0.0
      %467 = vmatpush.msra.mxu0 0.0
      %468 = vmatpush.msra.mxu0 0.0
      %469 = vmatpush.msra.mxu0 0.0
      %470 = vmatpush.msra.mxu0 0.0
      %471 = vmatpush.msra.mxu0 0.0
      %472 = vmatpush.msra.mxu0 0.0
      %473 = vmatpush.msra.mxu0 0.0
      %474 = vmatpush.msra.mxu0 0.0
      %475 = vmatpush.msra.mxu0 0.0
      %476 = vmatpush.msra.mxu0 0.0
      %477 = vmatpush.msra.mxu0 %v403
      %478 = vmatpush.msra.mxu0 %v402
      %479 = vmatpush.msra.mxu0 %v401
      %480 = vmatpush.msra.mxu0 %v400
      %481 = vmatmul.f32.gmra.mxu0 %v457
      %v482 = vpop.f32.mrf.mxu0
      %v483 = vadd.f32 0.0, %v482
      %484 = vmatmul.f32.gmra.mxu0 %v459
      %v485 = vpop.f32.mrf.mxu0
      %v486 = vadd.f32 0.0, %v485
      %487 = vmatmul.f32.gmra.mxu0 %v461
      %v488 = vpop.f32.mrf.mxu0
      %v489 = vadd.f32 0.0, %v488
      %490 = vmatmul.f32.gmra.mxu0 %v463
      %v491 = vpop.f32.mrf.mxu0
      %v492 = vadd.f32 0.0, %v491
      %493 = vdwg.mxu0
      %498 = vrot.lane.b32.xlu0 %v483, 32
      %v499 = vpop.permute.xlu0 %498
      %500 = vrot.lane.b32.xlu0 %v486, 32
      %v501 = vpop.permute.xlu0 %500
      %502 = vrot.lane.b32.xlu0 %v489, 32
      %v503 = vpop.permute.xlu0 %502
      %504 = vrot.lane.b32.xlu0 %v492, 32
      %v505 = vpop.permute.xlu0 %504
      %vm510 = vcmask 523520
      %511 = vst.msk [vmem:[#allocation2] sm:$0xff] %vm510, %v499
      %512 = vst.msk [vmem:[#allocation2 + $0x10] sm:$0xff] %vm510, %v501
      %513 = vst.msk [vmem:[#allocation2 + $0x20] sm:$0xff] %vm510, %v503
      %514 = vst.msk [vmem:[#allocation2 + $0x30] sm:$0xff] %vm510, %v505
      %515 = vrot.lane.b32.xlu0 %v227, 64
      %v516 = vpop.permute.xlu0 %515
      %517 = vrot.lane.b32.xlu0 %v229, 64
      %v518 = vpop.permute.xlu0 %517
      %519 = vrot.lane.b32.xlu0 %v231, 64
      %v520 = vpop.permute.xlu0 %519
      %521 = vrot.lane.b32.xlu0 %v233, 64
      %v522 = vpop.permute.xlu0 %521
      %v523 = vsel %vm360, %v516, 0
      %v525 = vsel %vm360, %v518, 0
      %v527 = vsel %vm360, %v520, 0
      %v529 = vsel %vm360, %v522, 0
      %531 = vmatpush.msra.mxu0 0.0
      %532 = vmatpush.msra.mxu0 0.0
      %533 = vmatpush.msra.mxu0 0.0
      %534 = vmatpush.msra.mxu0 0.0
      %535 = vmatpush.msra.mxu0 0.0
      %536 = vmatpush.msra.mxu0 0.0
      %537 = vmatpush.msra.mxu0 0.0
      %538 = vmatpush.msra.mxu0 0.0
      %539 = vmatpush.msra.mxu0 0.0
      %540 = vmatpush.msra.mxu0 0.0
      %541 = vmatpush.msra.mxu0 0.0
      %542 = vmatpush.msra.mxu0 0.0
      %543 = vmatpush.msra.mxu0 %v403
      %544 = vmatpush.msra.mxu0 %v402
      %545 = vmatpush.msra.mxu0 %v401
      %546 = vmatpush.msra.mxu0 %v400
      %547 = vmatmul.f32.gmra.mxu0 %v523
      %v548 = vpop.f32.mrf.mxu0
      %v549 = vadd.f32 0.0, %v548
      %550 = vmatmul.f32.gmra.mxu0 %v525
      %v551 = vpop.f32.mrf.mxu0
      %v552 = vadd.f32 0.0, %v551
      %553 = vmatmul.f32.gmra.mxu0 %v527
      %v554 = vpop.f32.mrf.mxu0
      %v555 = vadd.f32 0.0, %v554
      %556 = vmatmul.f32.gmra.mxu0 %v529
      %v557 = vpop.f32.mrf.mxu0
      %v558 = vadd.f32 0.0, %v557
      %559 = vdwg.mxu0
      %564 = vrot.lane.b32.xlu0 %v549, 64
      %v565 = vpop.permute.xlu0 %564
      %566 = vrot.lane.b32.xlu0 %v552, 64
      %v567 = vpop.permute.xlu0 %566
      %568 = vrot.lane.b32.xlu0 %v555, 64
      %v569 = vpop.permute.xlu0 %568
      %570 = vrot.lane.b32.xlu0 %v558, 64
      %v571 = vpop.permute.xlu0 %570
      %vm576 = vcmask 785920
      %577 = vst.msk [vmem:[#allocation2] sm:$0xff] %vm576, %v565
      %578 = vst.msk [vmem:[#allocation2 + $0x10] sm:$0xff] %vm576, %v567
      %579 = vst.msk [vmem:[#allocation2 + $0x20] sm:$0xff] %vm576, %v569
      %580 = vst.msk [vmem:[#allocation2 + $0x30] sm:$0xff] %vm576, %v571
      %581 = vrot.lane.b32.xlu0 %v227, 32
      %v582 = vpop.permute.xlu0 %581
      %583 = vrot.lane.b32.xlu0 %v229, 32
      %v584 = vpop.permute.xlu0 %583
      %585 = vrot.lane.b32.xlu0 %v231, 32
      %v586 = vpop.permute.xlu0 %585
      %587 = vrot.lane.b32.xlu0 %v233, 32
      %v588 = vpop.permute.xlu0 %587
      %v589 = vsel %vm360, %v582, 0
      %v591 = vsel %vm360, %v584, 0
      %v593 = vsel %vm360, %v586, 0
      %v595 = vsel %vm360, %v588, 0
      %597 = vmatpush.msra.mxu0 0.0
      %598 = vmatpush.msra.mxu0 0.0
      %599 = vmatpush.msra.mxu0 0.0
      %600 = vmatpush.msra.mxu0 0.0
      %601 = vmatpush.msra.mxu0 0.0
      %602 = vmatpush.msra.mxu0 0.0
      %603 = vmatpush.msra.mxu0 0.0
      %604 = vmatpush.msra.mxu0 0.0
      %605 = vmatpush.msra.mxu0 0.0
      %606 = vmatpush.msra.mxu0 0.0
      %607 = vmatpush.msra.mxu0 0.0
      %608 = vmatpush.msra.mxu0 0.0
      %609 = vmatpush.msra.mxu0 %v403
      %610 = vmatpush.msra.mxu0 %v402
      %611 = vmatpush.msra.mxu0 %v401
      %612 = vmatpush.msra.mxu0 %v400
      %613 = vmatmul.f32.gmra.mxu0 %v589
      %v614 = vpop.f32.mrf.mxu0
      %v615 = vadd.f32 0.0, %v614
      %616 = vmatmul.f32.gmra.mxu0 %v591
      %v617 = vpop.f32.mrf.mxu0
      %v618 = vadd.f32 0.0, %v617
      %619 = vmatmul.f32.gmra.mxu0 %v593
      %v620 = vpop.f32.mrf.mxu0
      %v621 = vadd.f32 0.0, %v620
      %622 = vmatmul.f32.gmra.mxu0 %v595
      %v623 = vpop.f32.mrf.mxu0
      %v624 = vadd.f32 0.0, %v623
      %625 = vdwg.mxu0
      %630 = vrot.lane.b32.xlu0 %v615, 96
      %v631 = vpop.permute.xlu0 %630
      %632 = vrot.lane.b32.xlu0 %v618, 96
      %v633 = vpop.permute.xlu0 %632
      %634 = vrot.lane.b32.xlu0 %v621, 96
      %v635 = vpop.permute.xlu0 %634
      %636 = vrot.lane.b32.xlu0 %v624, 96
      %v637 = vpop.permute.xlu0 %636
      %vm642 = vcmask 1048320
      %643 = vst.msk [vmem:[#allocation2] sm:$0xff] %vm642, %v631
      %644 = vst.msk [vmem:[#allocation2 + $0x10] sm:$0xff] %vm642, %v633
      %645 = vst.msk [vmem:[#allocation2 + $0x20] sm:$0xff] %vm642, %v635
      %646 = vst.msk [vmem:[#allocation2 + $0x30] sm:$0xff] %vm642, %v637
      %v648 = vsel %vm360, %v228, 0
      %v651 = vsel %vm360, %v230, 0
      %v654 = vsel %vm360, %v232, 0
      %v657 = vsel %vm360, %v234, 0
      %659 = vmatpush.msra.mxu0 0.0
      %660 = vmatpush.msra.mxu0 0.0
      %661 = vmatpush.msra.mxu0 0.0
      %662 = vmatpush.msra.mxu0 0.0
      %663 = vmatpush.msra.mxu0 0.0
      %664 = vmatpush.msra.mxu0 0.0
      %665 = vmatpush.msra.mxu0 0.0
      %666 = vmatpush.msra.mxu0 0.0
      %667 = vmatpush.msra.mxu0 0.0
      %668 = vmatpush.msra.mxu0 0.0
      %669 = vmatpush.msra.mxu0 0.0
      %670 = vmatpush.msra.mxu0 0.0
      %671 = vmatpush.msra.mxu0 %v403
      %672 = vmatpush.msra.mxu0 %v402
      %673 = vmatpush.msra.mxu0 %v401
      %674 = vmatpush.msra.mxu0 %v400
      %675 = vmatmul.f32.gmra.mxu0 %v648
      %v676 = vpop.f32.mrf.mxu0
      %v677 = vadd.f32 0.0, %v676
      %678 = vmatmul.f32.gmra.mxu0 %v651
      %v679 = vpop.f32.mrf.mxu0
      %v680 = vadd.f32 0.0, %v679
      %681 = vmatmul.f32.gmra.mxu0 %v654
      %v682 = vpop.f32.mrf.mxu0
      %v683 = vadd.f32 0.0, %v682
      %684 = vmatmul.f32.gmra.mxu0 %v657
      %v685 = vpop.f32.mrf.mxu0
      %v686 = vadd.f32 0.0, %v685
      %687 = vdwg.mxu0
      %688 = vst.msk [vmem:[#allocation2 + $0x8] sm:$0xff] %vm360, %v677
      %689 = vst.msk [vmem:[#allocation2 + $0x18] sm:$0xff] %vm360, %v680
      %690 = vst.msk [vmem:[#allocation2 + $0x28] sm:$0xff] %vm360, %v683
      %691 = vst.msk [vmem:[#allocation2 + $0x38] sm:$0xff] %vm360, %v686
      %692 = vrot.lane.b32.xlu0 %v228, 96
      %v693 = vpop.permute.xlu0 %692
      %694 = vrot.lane.b32.xlu0 %v230, 96
      %v695 = vpop.permute.xlu0 %694
      %696 = vrot.lane.b32.xlu0 %v232, 96
      %v697 = vpop.permute.xlu0 %696
      %698 = vrot.lane.b32.xlu0 %v234, 96
      %v699 = vpop.permute.xlu0 %698
      %v700 = vsel %vm360, %v693, 0
      %v702 = vsel %vm360, %v695, 0
      %v704 = vsel %vm360, %v697, 0
      %v706 = vsel %vm360, %v699, 0
      %708 = vmatpush.msra.mxu0 0.0
      %709 = vmatpush.msra.mxu0 0.0
      %710 = vmatpush.msra.mxu0 0.0
      %711 = vmatpush.msra.mxu0 0.0
      %712 = vmatpush.msra.mxu0 0.0
      %713 = vmatpush.msra.mxu0 0.0
      %714 = vmatpush.msra.mxu0 0.0
      %715 = vmatpush.msra.mxu0 0.0
      %716 = vmatpush.msra.mxu0 0.0
      %717 = vmatpush.msra.mxu0 0.0
      %718 = vmatpush.msra.mxu0 0.0
      %719 = vmatpush.msra.mxu0 0.0
      %720 = vmatpush.msra.mxu0 %v403
      %721 = vmatpush.msra.mxu0 %v402
      %722 = vmatpush.msra.mxu0 %v401
      %723 = vmatpush.msra.mxu0 %v400
      %724 = vmatmul.f32.gmra.mxu0 %v700
      %v725 = vpop.f32.mrf.mxu0
      %v726 = vadd.f32 0.0, %v725
      %727 = vmatmul.f32.gmra.mxu0 %v702
      %v728 = vpop.f32.mrf.mxu0
      %v729 = vadd.f32 0.0, %v728
      %730 = vmatmul.f32.gmra.mxu0 %v704
      %v731 = vpop.f32.mrf.mxu0
      %v732 = vadd.f32 0.0, %v731
      %733 = vmatmul.f32.gmra.mxu0 %v706
      %v734 = vpop.f32.mrf.mxu0
      %v735 = vadd.f32 0.0, %v734
      %736 = vdwg.mxu0
      %741 = vrot.lane.b32.xlu0 %v726, 32
      %v742 = vpop.permute.xlu0 %741
      %743 = vrot.lane.b32.xlu0 %v729, 32
      %v744 = vpop.permute.xlu0 %743
      %745 = vrot.lane.b32.xlu0 %v732, 32
      %v746 = vpop.permute.xlu0 %745
      %747 = vrot.lane.b32.xlu0 %v735, 32
      %v748 = vpop.permute.xlu0 %747
      %753 = vst.msk [vmem:[#allocation2 + $0x8] sm:$0xff] %vm510, %v742
      %754 = vst.msk [vmem:[#allocation2 + $0x18] sm:$0xff] %vm510, %v744
      %755 = vst.msk [vmem:[#allocation2 + $0x28] sm:$0xff] %vm510, %v746
      %756 = vst.msk [vmem:[#allocation2 + $0x38] sm:$0xff] %vm510, %v748
      %757 = vrot.lane.b32.xlu0 %v228, 64
      %v758 = vpop.permute.xlu0 %757
      %759 = vrot.lane.b32.xlu0 %v230, 64
      %v760 = vpop.permute.xlu0 %759
      %761 = vrot.lane.b32.xlu0 %v232, 64
      %v762 = vpop.permute.xlu0 %761
      %763 = vrot.lane.b32.xlu0 %v234, 64
      %v764 = vpop.permute.xlu0 %763
      %v765 = vsel %vm360, %v758, 0
      %v767 = vsel %vm360, %v760, 0
      %v769 = vsel %vm360, %v762, 0
      %v771 = vsel %vm360, %v764, 0
      %773 = vmatpush.msra.mxu0 0.0
      %774 = vmatpush.msra.mxu0 0.0
      %775 = vmatpush.msra.mxu0 0.0
      %776 = vmatpush.msra.mxu0 0.0
      %777 = vmatpush.msra.mxu0 0.0
      %778 = vmatpush.msra.mxu0 0.0
      %779 = vmatpush.msra.mxu0 0.0
      %780 = vmatpush.msra.mxu0 0.0
      %781 = vmatpush.msra.mxu0 0.0
      %782 = vmatpush.msra.mxu0 0.0
      %783 = vmatpush.msra.mxu0 0.0
      %784 = vmatpush.msra.mxu0 0.0
      %785 = vmatpush.msra.mxu0 %v403
      %786 = vmatpush.msra.mxu0 %v402
      %787 = vmatpush.msra.mxu0 %v401
      %788 = vmatpush.msra.mxu0 %v400
      %789 = vmatmul.f32.gmra.mxu0 %v765
      %v790 = vpop.f32.mrf.mxu0
      %v791 = vadd.f32 0.0, %v790
      %792 = vmatmul.f32.gmra.mxu0 %v767
      %v793 = vpop.f32.mrf.mxu0
      %v794 = vadd.f32 0.0, %v793
      %795 = vmatmul.f32.gmra.mxu0 %v769
      %v796 = vpop.f32.mrf.mxu0
      %v797 = vadd.f32 0.0, %v796
      %798 = vmatmul.f32.gmra.mxu0 %v771
      %v799 = vpop.f32.mrf.mxu0
      %v800 = vadd.f32 0.0, %v799
      %801 = vdwg.mxu0
      %806 = vrot.lane.b32.xlu0 %v791, 64
      %v807 = vpop.permute.xlu0 %806
      %808 = vrot.lane.b32.xlu0 %v794, 64
      %v809 = vpop.permute.xlu0 %808
      %810 = vrot.lane.b32.xlu0 %v797, 64
      %v811 = vpop.permute.xlu0 %810
      %812 = vrot.lane.b32.xlu0 %v800, 64
      %v813 = vpop.permute.xlu0 %812
      %818 = vst.msk [vmem:[#allocation2 + $0x8] sm:$0xff] %vm576, %v807
      %819 = vst.msk [vmem:[#allocation2 + $0x18] sm:$0xff] %vm576, %v809
      %820 = vst.msk [vmem:[#allocation2 + $0x28] sm:$0xff] %vm576, %v811
      %821 = vst.msk [vmem:[#allocation2 + $0x38] sm:$0xff] %vm576, %v813
      %822 = vrot.lane.b32.xlu0 %v228, 32
      %v823 = vpop.permute.xlu0 %822
      %824 = vrot.lane.b32.xlu0 %v230, 32
      %v825 = vpop.permute.xlu0 %824
      %826 = vrot.lane.b32.xlu0 %v232, 32
      %v827 = vpop.permute.xlu0 %826
      %828 = vrot.lane.b32.xlu0 %v234, 32
      %v829 = vpop.permute.xlu0 %828
      %v830 = vsel %vm360, %v823, 0
      %v832 = vsel %vm360, %v825, 0
      %v834 = vsel %vm360, %v827, 0
      %v836 = vsel %vm360, %v829, 0
      %838 = vmatpush.msra.mxu0 0.0
      %839 = vmatpush.msra.mxu0 0.0
      %840 = vmatpush.msra.mxu0 0.0
      %841 = vmatpush.msra.mxu0 0.0
      %842 = vmatpush.msra.mxu0 0.0
      %843 = vmatpush.msra.mxu0 0.0
      %844 = vmatpush.msra.mxu0 0.0
      %845 = vmatpush.msra.mxu0 0.0
      %846 = vmatpush.msra.mxu0 0.0
      %847 = vmatpush.msra.mxu0 0.0
      %848 = vmatpush.msra.mxu0 0.0
      %849 = vmatpush.msra.mxu0 0.0
      %850 = vmatpush.msra.mxu0 %v403
      %851 = vmatpush.msra.mxu0 %v402
      %852 = vmatpush.msra.mxu0 %v401
      %853 = vmatpush.msra.mxu0 %v400
      %854 = vmatmul.f32.gmra.mxu0 %v830
      %v855 = vpop.f32.mrf.mxu0
      %v856 = vadd.f32 0.0, %v855
      %857 = vmatmul.f32.gmra.mxu0 %v832
      %v858 = vpop.f32.mrf.mxu0
      %v859 = vadd.f32 0.0, %v858
      %860 = vmatmul.f32.gmra.mxu0 %v834
      %v861 = vpop.f32.mrf.mxu0
      %v862 = vadd.f32 0.0, %v861
      %863 = vmatmul.f32.gmra.mxu0 %v836
      %v864 = vpop.f32.mrf.mxu0
      %v865 = vadd.f32 0.0, %v864
      %866 = vdwg.mxu0
      %871 = vrot.lane.b32.xlu0 %v856, 96
      %v872 = vpop.permute.xlu0 %871
      %873 = vrot.lane.b32.xlu0 %v859, 96
      %v874 = vpop.permute.xlu0 %873
      %875 = vrot.lane.b32.xlu0 %v862, 96
      %v876 = vpop.permute.xlu0 %875
      %877 = vrot.lane.b32.xlu0 %v865, 96
      %v878 = vpop.permute.xlu0 %877
      %883 = vst.msk [vmem:[#allocation2 + $0x8] sm:$0xff] %vm642, %v872
      %884 = vst.msk [vmem:[#allocation2 + $0x18] sm:$0xff] %vm642, %v874
      %885 = vst.msk [vmem:[#allocation2 + $0x28] sm:$0xff] %vm642, %v876
      %886 = vst.msk [vmem:[#allocation2 + $0x38] sm:$0xff] %vm642, %v878
      %v887 = vld [vmem:[#allocation2] sm:$0xff]
      %v888 = vld [vmem:[#allocation2 + $0x8] sm:$0xff]
      %v889 = vld [vmem:[#allocation2 + $0x10] sm:$0xff]
      %v890 = vld [vmem:[#allocation2 + $0x18] sm:$0xff]
      %v891 = vld [vmem:[#allocation2 + $0x20] sm:$0xff]
      %v892 = vld [vmem:[#allocation2 + $0x28] sm:$0xff]
      %v893 = vld [vmem:[#allocation2 + $0x30] sm:$0xff]
      %v894 = vld [vmem:[#allocation2 + $0x38] sm:$0xff]
      %v895 = vadd.f32 %v211, %v219
      %v896 = vadd.f32 %v212, %v220
      %v897 = vadd.f32 %v213, %v221
      %v898 = vadd.f32 %v214, %v222
      %v899 = vadd.f32 %v215, %v223
      %v900 = vadd.f32 %v216, %v224
      %v901 = vadd.f32 %v217, %v225
      %v902 = vadd.f32 %v218, %v226
      %v903 = vadd.f32 %v895, %v227
      %v904 = vadd.f32 %v896, %v228
      %v905 = vadd.f32 %v897, %v229
      %v906 = vadd.f32 %v898, %v230
      %v907 = vadd.f32 %v899, %v231
      %v908 = vadd.f32 %v900, %v232
      %v909 = vadd.f32 %v901, %v233
      %v910 = vadd.f32 %v902, %v234
      %v911 = vadd.f32 %v887, 3.0
      %v912 = vadd.f32 %v888, 3.0
      %v913 = vadd.f32 %v889, 3.0
      %v914 = vadd.f32 %v890, 3.0
      %v915 = vadd.f32 %v891, 3.0
      %v916 = vadd.f32 %v892, 3.0
      %v917 = vadd.f32 %v893, 3.0
      %v918 = vadd.f32 %v894, 3.0
      %v919 = vmax.f32 %v911, 0.0
      %v920 = vmax.f32 %v912, 0.0
      %v921 = vmax.f32 %v913, 0.0
      %v922 = vmax.f32 %v914, 0.0
      %v923 = vmax.f32 %v915, 0.0
      %v924 = vmax.f32 %v916, 0.0
      %v925 = vmax.f32 %v917, 0.0
      %v926 = vmax.f32 %v918, 0.0
      %v927 = vmin.f32 %v919, 6.0
      %v928 = vmin.f32 %v920, 6.0
      %v929 = vmin.f32 %v921, 6.0
      %v930 = vmin.f32 %v922, 6.0
      %v931 = vmin.f32 %v923, 6.0
      %v932 = vmin.f32 %v924, 6.0
      %v933 = vmin.f32 %v925, 6.0
      %v934 = vmin.f32 %v926, 6.0
      %v935 = vmul.f32 %v927, 0.16666667
      %v936 = vmul.f32 %v928, 0.16666667
      %v937 = vmul.f32 %v929, 0.16666667
      %v938 = vmul.f32 %v930, 0.16666667
      %v939 = vmul.f32 %v931, 0.16666667
      %v940 = vmul.f32 %v932, 0.16666667
      %v941 = vmul.f32 %v933, 0.16666667
      %v942 = vmul.f32 %v934, 0.16666667
      %v943 = vmul.f32 %v935, %v903
      %v944 = vmul.f32 %v936, %v904
      %v945 = vmul.f32 %v937, %v905
      %v946 = vmul.f32 %v938, %v906
      %v947 = vmul.f32 %v939, %v907
      %v948 = vmul.f32 %v940, %v908
      %v949 = vmul.f32 %v941, %v909
      %v950 = vmul.f32 %v942, %v910
      %951 = vst [vmem:[%s210] sm:$0xff] %v943
      %952 = vst [vmem:[%s210 + $0x8] sm:$0xff] %v944
      %953 = vst [vmem:[%s210 + $0x10] sm:$0xff] %v945
      %954 = vst [vmem:[%s210 + $0x18] sm:$0xff] %v946
      %955 = vst [vmem:[%s210 + $0x20] sm:$0xff] %v947
      %956 = vst [vmem:[%s210 + $0x28] sm:$0xff] %v948
      %957 = vst [vmem:[%s210 + $0x30] sm:$0xff] %v949
      %958 = vst [vmem:[%s210 + $0x38] sm:$0xff] %v950
      %p959 = scmp.lt.s32.totalorder %s14, 1
      %s960 = scalar_select %p959, %s14, 1
      %s961 = smul.addr %s960, 8
      %s962 = smul.addr %s961, 8
      %s963 = scalar_lea.vmem %s3, %s962
      // Predicated region
      $region33: #{channel_attention_forward.1} parent=31 // pred_check
        %p964 = pneg %p110
      $region34: #{channel_attention_forward.1} parent=31 // pred_check_branch
        %966 = sbr.rel (%p964) target = $region36
      $region35: #{channel_attention_forward.1} parent=31 // pred_region
        _
      $region36: #{channel_attention_forward.1} parent=31 // pred_fallthru
        _
    $region32: #{channel_attention_forward.1} parent=5 // pred_fallthru
      _
    %p967 = scmp.le.s32.totalorder 2, %s9
    // Predicated region
    $region37: #{channel_attention_forward.1} parent=5 // pred_check
      %p968 = pneg %p967
    $region38: #{channel_attention_forward.1} parent=5 // pred_check_branch
      %970 = sbr.rel (%p968) target = $region40
    $region39: #{channel_attention_forward.1} parent=5 // pred_region
      %s971 = ssub.s32 %s9, 2
      // Predicated region
      $region41: #{channel_attention_forward.1} parent=39 // pred_check
        %p972 = pneg %p116
      $region42: #{channel_attention_forward.1} parent=39 // pred_check_branch
        %974 = sbr.rel (%p972) target = $region44
      $region43: #{channel_attention_forward.1} parent=39 // pred_region
        %p975 = scmp.lt.s32.totalorder %s15, 1
        %s976 = scalar_select %p975, %s15, 1
        %s977 = smul.addr %s976, 8
        %s978 = smul.addr %s977, 8
        %s979 = scalar_lea.vmem %s3, %s978
      $region44: #{channel_attention_forward.1} parent=39 // pred_fallthru
        _
    $region40: #{channel_attention_forward.1} parent=5 // pred_fallthru
      _
  $region6: #{channel_attention_forward.1} parent=0 // loop_footer
    %s13 = sadd.s32 1, %s9
  $region7: #{channel_attention_forward.1} parent=0 // loop_footer_branch
    %8 = sbr.rel target = $region3
  $region8: #{channel_attention_forward.1} parent=0 // loop_exit
    _

</llo_original>
